<compile_context>
chip_gen: v7x
topology: tpu7x:2x2x1
jax: 0.10.0
libtpu: 0.0.40
codegen_flags: <defaults>
</compile_context>

<pallas_src>
import functools

import jax
import jax.numpy as jnp
from jax.experimental import pallas as pl
from jax.experimental.pallas import tpu as pltpu


# ----------------------------------------------------------------------------
# Pallas kernels
# ----------------------------------------------------------------------------
def _v1_kernel(x_ref, edge_ref, wt_ref, w_ref, o_ref, *, cf):
    # x_ref:    [TL, E]  token embeddings (f32)
    # edge_ref: [TL, V]  normalized edge-matrix rows gathered per token (f32)
    # wt_ref:   [E, V]   concept table, pre-transposed (f32 or bf16)
    # w_ref:    [V, E]   concept table (bf16) for the output matmul
    # o_ref:    [TL, E]  f32
    wt = wt_ref[...]
    x = x_ref[...].astype(wt.dtype)
    # logits[t, v] = <x[t], w[v]>  -- clean [M,K]x[K,N], f32 accumulation.
    logits = jnp.dot(x, wt, preferred_element_type=jnp.float32)
    mask = (edge_ref[...] > 0.0).astype(jnp.float32)
    cw = mask * logits * cf
    m = jnp.max(cw, axis=-1, keepdims=True)
    ex = jnp.exp(cw - m)
    denom = jnp.sum(ex, axis=-1, keepdims=True)
    p = ex * pl.reciprocal(denom, approx=True)          # EUP, frees VALU slot
    w = w_ref[...]
    o_ref[...] = jnp.dot(p.astype(w.dtype), w,
                         preferred_element_type=jnp.float32).astype(o_ref.dtype)


def _v2_kernel(edge_ref, cos_ref, lamcf_ref, aff_ref, w_ref, o_ref):
    # edge_ref:  [TL, V]  normalized edge rows for this (batch, L-tile)
    # cos_ref:   [B,  V]  |cos(context_rep_b, concept_v)| (whole table resident)
    # lamcf_ref: [1,  V]  lambda * concentration_factor
    # aff_ref:   [1,  V]  (1 - lambda) * affectiveness * concentration_factor
    # w_ref:     [V,  E]  concept table (bf16)
    # o_ref:     [TL, E]  f32
    b = pl.program_id(0)
    e = edge_ref[...]
    mask = (e > 0.0).astype(jnp.float32)
    cos_row = cos_ref[pl.ds(b, 1), :]                    # [1, V], this batch
    cw = lamcf_ref[...] * (e * cos_row) + mask * aff_ref[...]
    m = jnp.max(cw, axis=-1, keepdims=True)
    ex = jnp.exp(cw - m)
    p = ex * pl.reciprocal(jnp.sum(ex, axis=-1, keepdims=True), approx=True)
    w = w_ref[...]
    o_ref[...] = jnp.dot(p.astype(w.dtype), w,
                         preferred_element_type=jnp.float32).astype(o_ref.dtype)


# ----------------------------------------------------------------------------
# Pallas wrappers
# ----------------------------------------------------------------------------
def _round_up(n, m):
    return ((n + m - 1) // m) * m


def _choose_token_tile(n, target):
    # Biggest tile up to `target` (256 for v6e/v7x; use 128 on v5e), padding n
    # up instead of asserting divisibility. Padded rows have zero edge rows so
    # their softmax stays finite; they are sliced off afterwards.
    tl = min(target, _round_up(max(n, 1), 8))
    return tl, _round_up(n, tl)


def _vmem_limit(per_step_bytes):
    # Double-buffering + headroom; clamp to 64 MiB (v7x-safe, below physical
    # VMEM on every generation, above the 16/32 MiB scoped defaults).
    return int(min(max(2 * per_step_bytes + (4 << 20), 32 << 20), 64 << 20))


def graph_attention_v1_pallas(x_flat, edge_rows, concept_w, cf, *,
                              token_tile=256, logits_dtype=jnp.float32):
    n_tok, E = x_flat.shape
    V = concept_w.shape[0]
    tl, n_pad = _choose_token_tile(n_tok, token_tile)
    if n_pad != n_tok:
        pad = n_pad - n_tok
        x_flat = jnp.pad(x_flat, ((0, pad), (0, 0)))
        edge_rows = jnp.pad(edge_rows, ((0, pad), (0, 0)))
    n_blocks = n_pad // tl

    w_t = concept_w.T.astype(logits_dtype)     # [E, V] for the logits matmul
    w_bf = concept_w.astype(jnp.bfloat16)      # [V, E] for the output matmul
    wt_itemsize = 2 if logits_dtype == jnp.bfloat16 else 4

    # TODO(synk): for very large V on v7x (64 MiB VMEM) the vocab axis should
    # be tiled with a flash-style online softmax instead of holding full-V rows.
    per_step = (tl * E * 4 + tl * V * 4 + tl * E * 4
                + E * V * wt_itemsize + V * E * 2)

    out = pl.pallas_call(
        functools.partial(_v1_kernel, cf=float(cf)),
        out_shape=jax.ShapeDtypeStruct((n_pad, E), jnp.float32),
        grid_spec=pltpu.PrefetchScalarGridSpec(
            num_scalar_prefetch=0,
            grid=(n_blocks,),
            in_specs=[
                pl.BlockSpec((tl, E), lambda i: (i, 0)),
                pl.BlockSpec((tl, V), lambda i: (i, 0)),
                pl.BlockSpec((E, V), lambda i: (0, 0)),
                pl.BlockSpec((V, E), lambda i: (0, 0)),
            ],
            out_specs=pl.BlockSpec((tl, E), lambda i: (i, 0)),
        ),
        compiler_params=pltpu.CompilerParams(
            dimension_semantics=("parallel",),
            vmem_limit_bytes=_vmem_limit(per_step)),
    )(x_flat, edge_rows, w_t, w_bf)
    return out[:n_tok]


def graph_attention_v2_pallas(edge_rows_blv, cos_bv, lam, aff, concept_w, cf, *,
                              token_tile=256):
    B, L, V = edge_rows_blv.shape
    E = concept_w.shape[1]
    tl, l_pad = _choose_token_tile(L, token_tile)
    if l_pad != L:
        edge_rows_blv = jnp.pad(edge_rows_blv, ((0, 0), (0, l_pad - L), (0, 0)))
    n_l_blocks = l_pad // tl
    edge_flat = edge_rows_blv.reshape(B * l_pad, V)

    lam = lam.reshape(1, V).astype(jnp.float32)
    aff = aff.reshape(1, V).astype(jnp.float32)
    lam_cf = lam * cf                               # lambda * cf
    aff_term = (1.0 - lam) * aff * cf               # (1-lambda) * aff * cf
    cos_bv = cos_bv.astype(jnp.float32)
    w_bf = concept_w.astype(jnp.bfloat16)

    per_step = (tl * V * 4 + B * V * 4 + 2 * V * 4 + V * E * 2 + tl * E * 4)

    out = pl.pallas_call(
        _v2_kernel,
        out_shape=jax.ShapeDtypeStruct((B * l_pad, E), jnp.float32),
        grid_spec=pltpu.PrefetchScalarGridSpec(
            num_scalar_prefetch=0,
            grid=(B, n_l_blocks),
            in_specs=[
                pl.BlockSpec((tl, V), lambda b, j: (b * n_l_blocks + j, 0)),
                pl.BlockSpec((B, V), lambda b, j: (0, 0)),   # full cos table
                pl.BlockSpec((1, V), lambda b, j: (0, 0)),
                pl.BlockSpec((1, V), lambda b, j: (0, 0)),
                pl.BlockSpec((V, E), lambda b, j: (0, 0)),
            ],
            out_specs=pl.BlockSpec((tl, E),
                                   lambda b, j: (b * n_l_blocks + j, 0)),
        ),
        compiler_params=pltpu.CompilerParams(
            dimension_semantics=("parallel", "parallel"),
            vmem_limit_bytes=_vmem_limit(per_step)),
    )(edge_flat, cos_bv, lam_cf, aff_term, w_bf)
    return out.reshape(B, l_pad, E)[:, :L]


# ----------------------------------------------------------------------------
# Plain-JAX glue reproducing the module's python-level logic
# ----------------------------------------------------------------------------
def normalize_edge_matrix(edge_matrix):
    # init_params: range = rowwise max - columnwise min
    rng = edge_matrix.max(axis=1) - edge_matrix.min(axis=0)
    rng = rng[:, None]
    return edge_matrix / (rng + (rng == 0).astype(jnp.float32))


def hierarchical_sentence_rep(sent_embed):
    # sent_embed: [B, S, E]
    S = sent_embed.shape[1]
    N = 3
    pooled = [sent_embed.mean(axis=1)]
    for n in range(1, N):
        grams = [sent_embed[:, i:i + n + 1, :].max(axis=1) for i in range(S)]
        pooled.append(jnp.stack(grams, axis=1).mean(axis=1))
    return jnp.stack(pooled, axis=1).mean(axis=1)  # [B, E]


def context_representation(src_embed, tgt_embed):
    S = tgt_embed.shape[1]
    ctx_len = src_embed.shape[1] // S
    reps = [hierarchical_sentence_rep(src_embed[:, i * S:(i + 1) * S])
            for i in range(ctx_len)]
    reps.append(hierarchical_sentence_rep(tgt_embed))
    return jnp.stack(reps, axis=1).mean(axis=1)  # [B, E]


def forward_variant1(src, src_embed, tgt, tgt_embed, edge_norm, concept_w, cf):
    src_len = src.shape[1]
    ids = jnp.concatenate([src, tgt], axis=1)                 # [B, L]
    x = jnp.concatenate([src_embed, tgt_embed], axis=1)       # [B, L, E]
    B, L, E = x.shape
    # TODO(synk): the gather still materializes a [B*L, V] copy in HBM; moving
    # it into the kernel (scalar-prefetched ids + per-row DMA from an ANY-space
    # edge_norm ref) would remove one full pass over B*L*V*4 bytes.
    edge_rows = edge_norm[ids.reshape(-1)]                    # [B*L, V]
    out = graph_attention_v1_pallas(x.reshape(B * L, E), edge_rows,
                                    concept_w, cf)
    out = out.reshape(B, L, E)
    return out[:, :src_len, :], out[:, src_len:, :]


def forward_variant2(src, src_embed, tgt, tgt_embed, edge_norm, concept_w,
                     lam, aff, cf):
    ctx = context_representation(src_embed, tgt_embed)        # [B, E]
    src_len = src.shape[1]
    ids = jnp.concatenate([src, tgt], axis=1)                 # [B, L]
    # |cosine| between context rep and every concept embedding (tiny, glue)
    num = ctx @ concept_w.T
    denom = jnp.maximum(
        jnp.linalg.norm(ctx, axis=-1, keepdims=True)
        * jnp.linalg.norm(concept_w, axis=-1)[None, :], 1e-8)
    cos = jnp.abs(num / denom)                                # [B, V]
    edge_rows = edge_norm[ids]                                # [B, L, V]
    out = graph_attention_v2_pallas(edge_rows, cos, lam, aff, concept_w, cf)
    return out[:, :src_len, :], out[:, src_len:, :]


# ----------------------------------------------------------------------------
# Pure-jnp references (mirror the PyTorch forward exactly, f32 throughout)
# ----------------------------------------------------------------------------
def ref_variant1(src, src_embed, tgt, tgt_embed, edge_norm, concept_w, cf):
    src_len = src.shape[1]
    ids = jnp.concatenate([src, tgt], axis=1)
    x = jnp.concatenate([src_embed, tgt_embed], axis=1)
    mask = (edge_norm[ids] > 0).astype(jnp.float32)
    cw = mask * jnp.einsum('ble,ve->blv', x, concept_w)
    p = jax.nn.softmax(cw * cf, axis=2)
    ce = jnp.einsum('blv,ve->ble', p, concept_w)
    return ce[:, :src_len], ce[:, src_len:]


def ref_variant2(src, src_embed, tgt, tgt_embed, edge_norm, concept_w, lam,
                 aff, cf):
    ctx = context_representation(src_embed, tgt_embed)
    src_len = src.shape[1]
    ids = jnp.concatenate([src, tgt], axis=1)
    num = ctx @ concept_w.T
    denom = jnp.maximum(
        jnp.linalg.norm(ctx, axis=-1, keepdims=True)
        * jnp.linalg.norm(concept_w, axis=-1)[None, :], 1e-8)
    cos = jnp.abs(num / denom)                                # [B, V]
    relatedness = edge_norm[ids] * cos[:, None, :]            # [B, L, V]
    mask = (edge_norm[ids] > 0).astype(jnp.float32)
    cw = lam * relatedness + (1 - lam) * mask * aff
    p = jax.nn.softmax(cw * cf, axis=2)
    ce = jnp.einsum('blv,ve->ble', p, concept_w)
    return ce[:, :src_len], ce[:, src_len:]


# ----------------------------------------------------------------------------
if __name__ == "__main__":
    key = jax.random.PRNGKey(0)
    V, E = 128, 128          # vocab_size, embed_size
    B, S = 2, 8              # batch, src_len == tgt_len
    keys = jax.random.split(key, 8)

    # deterministic synthetic parameters (shapes from the module's __init__)
    concept_w = jax.random.normal(keys[0], (V, E), jnp.float32)    # Embedding
    raw = jax.random.uniform(keys[1], (V, V), jnp.float32)
    edge_matrix = jnp.where(raw > 0.5, raw, 0.0)                   # sparse-ish
    edge_norm = normalize_edge_matrix(edge_matrix)
    affectiveness = jax.random.uniform(keys[2], (V,), jnp.float32)
    _lambda = jnp.full((V,), 0.5, jnp.float32)                     # GAW=None
    concentration_factor = 1.0

    # inputs
    src = jax.random.randint(keys[3], (B, S), 0, V)
    tgt = jax.random.randint(keys[4], (B, S), 0, V)
    src_embed = jax.random.normal(keys[5], (B, S, E), jnp.float32)
    tgt_embed = jax.random.normal(keys[6], (B, S, E), jnp.float32)

    # Tolerance note: the probability->embedding matmul runs in bf16 on the
    # MXU (f32 accumulation) and the softmax denom uses the approximate EUP
    # reciprocal, so compare against the f32 reference at 2e-2.
    TOL = dict(rtol=2e-2, atol=2e-2)

    # variant 1
    s1, t1 = forward_variant1(src, src_embed, tgt, tgt_embed,
                              edge_norm, concept_w, concentration_factor)
    jax.block_until_ready((s1, t1))
    rs1, rt1 = ref_variant1(src, src_embed, tgt, tgt_embed,
                            edge_norm, concept_w, concentration_factor)
    assert jnp.allclose(s1, rs1, **TOL)
    assert jnp.allclose(t1, rt1, **TOL)

    # variant 2
    s2, t2 = forward_variant2(src, src_embed, tgt, tgt_embed, edge_norm,
                              concept_w, _lambda, affectiveness,
                              concentration_factor)
    jax.block_until_ready((s2, t2))
    rs2, rt2 = ref_variant2(src, src_embed, tgt, tgt_embed, edge_norm,
                            concept_w, _lambda, affectiveness,
                            concentration_factor)
    assert jnp.allclose(s2, rs2, **TOL)
    assert jnp.allclose(t2, rt2, **TOL)

    # TODO(synk): variant == 0 has no defined forward behavior in the PyTorch
    # module (falls through, returns None), so it is not implemented.
    print("KERNEL_OK")
</pallas_src>

<mosaic_0001>
module attributes {stable_mosaic.version = 11 : i64} {
  func.func @_v1_kernel(%arg0: i32, %arg1: memref<32x128xf32, #tpu.memory_space<vmem>>, %arg2: memref<32x128xf32, #tpu.memory_space<vmem>>, %arg3: memref<128x128xf32, #tpu.memory_space<vmem>>, %arg4: memref<128x128xbf16, #tpu.memory_space<vmem>>, %arg5: memref<32x128xf32, #tpu.memory_space<vmem>>) attributes {dimension_semantics = [#tpu.dimension_semantics<parallel>], iteration_bounds = array<i64: 1>, scalar_prefetch = 0 : i64, scratch_operands = 0 : i64, tpu.core_type = #tpu.core_type<tc>, window_params = [{transform_indices = @transform_0, window_bounds = array<i64: 32, 128>}, {transform_indices = @transform_1, window_bounds = array<i64: 32, 128>}, {pipeline_mode = #tpu.pipeline_mode<synchronous>, transform_indices = @transform_2, window_bounds = array<i64: 128, 128>}, {pipeline_mode = #tpu.pipeline_mode<synchronous>, transform_indices = @transform_3, window_bounds = array<i64: 128, 128>}, {transform_indices = @transform_4, window_bounds = array<i64: 32, 128>}]} {
    %c0 = arith.constant 0 : index
    %c0_0 = arith.constant 0 : index
    %0 = vector.load %arg3[%c0, %c0_0] : memref<128x128xf32, #tpu.memory_space<vmem>>, vector<128x128xf32>
    %c0_1 = arith.constant 0 : index
    %c0_2 = arith.constant 0 : index
    %1 = vector.load %arg1[%c0_1, %c0_2] : memref<32x128xf32, #tpu.memory_space<vmem>>, vector<32x128xf32>
    %cst = arith.constant dense<0.000000e+00> : vector<32x128xf32>
    %2 = tpu.matmul %1, %0, %cst {dimension_numbers = #tpu.dot_dimension_numbers<[1], [0], [0], [1], [0, 0, 1, 1], [], []>} : vector<32x128xf32>, vector<128x128xf32>, vector<32x128xf32> -> vector<32x128xf32>
    %c0_3 = arith.constant 0 : index
    %c0_4 = arith.constant 0 : index
    %3 = vector.load %arg2[%c0_3, %c0_4] : memref<32x128xf32, #tpu.memory_space<vmem>>, vector<32x128xf32>
    %cst_5 = arith.constant 0.000000e+00 : f32
    %4 = vector.broadcast %cst_5 : f32 to vector<32x128xf32>
    %5 = arith.cmpf ogt, %3, %4 : vector<32x128xf32>
    %6 = arith.extui %5 : vector<32x128xi1> to vector<32x128xi32>
    %7 = arith.sitofp %6 : vector<32x128xi32> to vector<32x128xf32>
    %8 = arith.mulf %7, %2 : vector<32x128xf32>
    %cst_6 = arith.constant 1.000000e+00 : f32
    %9 = vector.broadcast %cst_6 : f32 to vector<32x128xf32>
    %10 = arith.mulf %8, %9 : vector<32x128xf32>
    %cst_7 = arith.constant dense<0xFF800000> : vector<32xf32>
    %11 = vector.multi_reduction <maximumf>, %10, %cst_7 [1] : vector<32x128xf32> to vector<32xf32>
    %12 = vector.shape_cast %11 : vector<32xf32> to vector<32x1xf32>
    %13 = vector.broadcast %12 : vector<32x1xf32> to vector<32x128xf32>
    %14 = arith.subf %10, %13 : vector<32x128xf32>
    %15 = math.exp %14 : vector<32x128xf32>
    %cst_8 = arith.constant dense<0.000000e+00> : vector<32xf32>
    %16 = vector.multi_reduction <add>, %15, %cst_8 [1] : vector<32x128xf32> to vector<32xf32>
    %17 = vector.shape_cast %16 : vector<32xf32> to vector<32x1xf32>
    %18 = tpu.reciprocal %17 {approx = true} : vector<32x1xf32> -> vector<32x1xf32>
    %19 = vector.broadcast %18 : vector<32x1xf32> to vector<32x128xf32>
    %20 = arith.mulf %15, %19 : vector<32x128xf32>
    %c0_9 = arith.constant 0 : index
    %c0_10 = arith.constant 0 : index
    %21 = vector.load %arg4[%c0_9, %c0_10] : memref<128x128xbf16, #tpu.memory_space<vmem>>, vector<128x128xbf16>
    %22 = arith.truncf %20 : vector<32x128xf32> to vector<32x128xbf16>
    %cst_11 = arith.constant dense<0.000000e+00> : vector<32x128xf32>
    %23 = tpu.matmul %22, %21, %cst_11 {dimension_numbers = #tpu.dot_dimension_numbers<[1], [0], [0], [1], [0, 0, 1, 1], [], []>} : vector<32x128xbf16>, vector<128x128xbf16>, vector<32x128xf32> -> vector<32x128xf32>
    %c0_12 = arith.constant 0 : index
    %c0_13 = arith.constant 0 : index
    %24 = vector.load %arg5[%c0_12, %c0_13] : memref<32x128xf32, #tpu.memory_space<vmem>>, vector<32x128xf32>
    tpu.vector_store %arg5[%c0_12, %c0_13], %23 {strides = array<i32>} : memref<32x128xf32, #tpu.memory_space<vmem>>, vector<32x128xf32>,
    return
  }
  func.func @transform_0(%arg0: i32) -> (i32, i32) {
    %c0_i32 = arith.constant 0 : i32
    %c0_i32_0 = arith.constant 0 : i32
    return %arg0, %c0_i32 : i32, i32
  }
  func.func @transform_1(%arg0: i32) -> (i32, i32) {
    %c0_i32 = arith.constant 0 : i32
    %c0_i32_0 = arith.constant 0 : i32
    return %arg0, %c0_i32 : i32, i32
  }
  func.func @transform_2(%arg0: i32) -> (i32, i32) {
    %c0_i32 = arith.constant 0 : i32
    %c0_i32_0 = arith.constant 0 : i32
    %c0_i32_1 = arith.constant 0 : i32
    return %c0_i32, %c0_i32_0 : i32, i32
  }
  func.func @transform_3(%arg0: i32) -> (i32, i32) {
    %c0_i32 = arith.constant 0 : i32
    %c0_i32_0 = arith.constant 0 : i32
    %c0_i32_1 = arith.constant 0 : i32
    return %c0_i32, %c0_i32_0 : i32, i32
  }
  func.func @transform_4(%arg0: i32) -> (i32, i32) {
    %c0_i32 = arith.constant 0 : i32
    %c0_i32_0 = arith.constant 0 : i32
    return %arg0, %c0_i32 : i32, i32
  }
}

</mosaic_0001>

<llo_original>
// kernel: tpu_custom_call.1
$region0: #{tpu_custom_call.1}
  #allocation0 [shape = 'u32[]', space=smem, size = 0x4, offset = 0x4, fixed_abs, tag = 'smem constant byte address 0x4 - core index']
  #allocation1 [shape = 'u32[144,128]{1,0:T(1,128)}', space=vmem, size = 0x12000, scoped, tag = 'internal scratch']
  %s0 = inlined_call_operand.hbm [shape: f32[32,128], index: 0, kind: input, shape index: {}]
  %s1 = inlined_call_operand.hbm [shape: f32[32,128], index: 1, kind: input, shape index: {}]
  %s2 = inlined_call_operand.hbm [shape: f32[128,128], index: 2, kind: input, shape index: {}]
  %s3 = inlined_call_operand.hbm [shape: bf16[128,128], index: 3, kind: input, shape index: {}]
  %s4 = inlined_call_operand.hbm [shape: f32[32,128], index: 4, kind: output, shape index: {}]
  %s5 = sld [smem:[#allocation0]]
  $region42: #{tpu_custom_call.1} parent=0
    _
  %s7 = ssub.s32 1, %s5
  %s8 = scalar_select 0, %s7, %s5
  $region1: #{tpu_custom_call.1} parent=0
    #allocation2 [shape = 'u8[16384]{0}', space=vmem, size = 0x4000, scoped, tag = 'input window, operand 0, single buffered']
    #allocation3 [shape = 's32[1]{0}', space=sflag, size = 0x4, scoped, tag = 'scoped memory for tpu_custom_call.1']
    #allocation4 [shape = 's32[1]{0}', space=sflag, size = 0x4, scoped, tag = 'scoped memory for tpu_custom_call.1']
    #allocation5 [shape = 'u8[16384]{0}', space=vmem, size = 0x4000, scoped, tag = 'input window, operand 1, single buffered']
    #allocation6 [shape = 's32[1]{0}', space=sflag, size = 0x4, scoped, tag = 'scoped memory for tpu_custom_call.1']
    #allocation7 [shape = 'u8[65536]{0}', space=vmem, size = 0x10000, scoped, tag = 'input window, operand 2, single buffered']
    #allocation8 [shape = 'u8[32768]{0}', space=vmem, size = 0x8000, scoped, tag = 'input window, operand 3, single buffered']
    #allocation9 [shape = 's32[1]{0}', space=sflag, size = 0x4, scoped, tag = 'scoped memory for tpu_custom_call.1']
    #allocation10 [shape = 'u8[16384]{0}', space=vmem, size = 0x4000, scoped, tag = 'output window, operand 0, single buffered']
    %9 = vsyncpa [#allocation3], 0
    %10 = vsyncpa [#allocation6], 0
    %11 = vsyncpa [#allocation9], 0
    %12 = vsyncpa [#allocation4], 0
    // Predicated region
    $region2: #{tpu_custom_call.1} parent=1 // pred_check
      _
    $region3: #{tpu_custom_call.1} parent=1 // pred_check_branch
      %14 = sbr.rel (0) target = $region5
    $region4: #{tpu_custom_call.1} parent=1 // pred_region
      %s16 = ssub.s32 512, 512
      %17 = vsyncadd [#allocation3], %s16
      %s18 = sshll.u32 [#allocation2], 4
      %s19 = int_to_ptr.vmem [resolvable:$true] %s18
      %24 = dma.hbm_to_vmem [thread:$0]  %s0, 512, %s19, [#allocation3], 128, 128, 8
    $region5: #{tpu_custom_call.1} parent=1 // pred_fallthru
      _
    // Predicated region
    $region6: #{tpu_custom_call.1} parent=1 // pred_check
      _
    $region7: #{tpu_custom_call.1} parent=1 // pred_check_branch
      %26 = sbr.rel (0) target = $region9
    $region8: #{tpu_custom_call.1} parent=1 // pred_region
      %s28 = ssub.s32 512, 512
      %29 = vsyncadd [#allocation6], %s28
      %s30 = sshll.u32 [#allocation5], 4
      %s31 = int_to_ptr.vmem [resolvable:$true] %s30
      %36 = dma.hbm_to_vmem [thread:$0]  %s1, 512, %s31, [#allocation6], 128, 128, 8
    $region9: #{tpu_custom_call.1} parent=1 // pred_fallthru
      _
    // Predicated region
    $region10: #{tpu_custom_call.1} parent=1 // pred_check
      _
    $region11: #{tpu_custom_call.1} parent=1 // pred_check_branch
      %38 = sbr.rel (0) target = $region13
    $region12: #{tpu_custom_call.1} parent=1 // pred_region
      %s40 = ssub.s32 2048, 2048
      %41 = vsyncadd [#allocation6], %s40
      %s42 = sshll.u32 [#allocation7], 4
      %s43 = int_to_ptr.vmem [resolvable:$true] %s42
      %48 = dma.hbm_to_vmem [thread:$0]  %s2, 2048, %s43, [#allocation6], 128, 128, 8
    $region13: #{tpu_custom_call.1} parent=1 // pred_fallthru
      _
    // Predicated region
    $region14: #{tpu_custom_call.1} parent=1 // pred_check
      _
    $region15: #{tpu_custom_call.1} parent=1 // pred_check_branch
      %50 = sbr.rel (0) target = $region17
    $region16: #{tpu_custom_call.1} parent=1 // pred_region
      %s52 = ssub.s32 1024, 1024
      %53 = vsyncadd [#allocation9], %s52
      %s54 = sshll.u32 [#allocation8], 4
      %s55 = int_to_ptr.vmem [resolvable:$true] %s54
      %60 = dma.hbm_to_vmem [thread:$0]  %s3, 1024, %s55, [#allocation9], 64, 64, 4
    $region17: #{tpu_custom_call.1} parent=1 // pred_fallthru
      _
    // Predicated region
    $region18: #{tpu_custom_call.1} parent=1 // pred_check
      _
    $region19: #{tpu_custom_call.1} parent=1 // pred_check_branch
      %62 = sbr.rel (0) target = $region21
    $region20: #{tpu_custom_call.1} parent=1 // pred_region
      %63 = dma.done [#allocation3], 512
    $region21: #{tpu_custom_call.1} parent=1 // pred_fallthru
      _
    // Predicated region
    $region22: #{tpu_custom_call.1} parent=1 // pred_check
      _
    $region23: #{tpu_custom_call.1} parent=1 // pred_check_branch
      %65 = sbr.rel (0) target = $region25
    $region24: #{tpu_custom_call.1} parent=1 // pred_region
      %66 = dma.done [#allocation6], 512
    $region25: #{tpu_custom_call.1} parent=1 // pred_fallthru
      _
    // Predicated region
    $region26: #{tpu_custom_call.1} parent=1 // pred_check
      _
    $region27: #{tpu_custom_call.1} parent=1 // pred_check_branch
      %68 = sbr.rel (0) target = $region29
    $region28: #{tpu_custom_call.1} parent=1 // pred_region
      %69 = dma.done [#allocation6], 2048
    $region29: #{tpu_custom_call.1} parent=1 // pred_fallthru
      _
    // Predicated region
    $region30: #{tpu_custom_call.1} parent=1 // pred_check
      _
    $region31: #{tpu_custom_call.1} parent=1 // pred_check_branch
      %71 = sbr.rel (0) target = $region33
    $region32: #{tpu_custom_call.1} parent=1 // pred_region
      %72 = dma.done [#allocation9], 1024
    $region33: #{tpu_custom_call.1} parent=1 // pred_fallthru
      _
    %v74 = vld [vmem:[#allocation7] sm:$0xff]
    %v75 = vld [vmem:[#allocation7 + $0x8] sm:$0xff]
    %v76 = vld [vmem:[#allocation7 + $0x10] sm:$0xff]
    %v77 = vld [vmem:[#allocation7 + $0x18] sm:$0xff]
    %v78 = vld [vmem:[#allocation7 + $0x20] sm:$0xff]
    %v79 = vld [vmem:[#allocation7 + $0x28] sm:$0xff]
    %v80 = vld [vmem:[#allocation7 + $0x30] sm:$0xff]
    %v81 = vld [vmem:[#allocation7 + $0x38] sm:$0xff]
    %v82 = vld [vmem:[#allocation7 + $0x40] sm:$0xff]
    %v83 = vld [vmem:[#allocation7 + $0x48] sm:$0xff]
    %v84 = vld [vmem:[#allocation7 + $0x50] sm:$0xff]
    %v85 = vld [vmem:[#allocation7 + $0x58] sm:$0xff]
    %v86 = vld [vmem:[#allocation7 + $0x60] sm:$0xff]
    %v87 = vld [vmem:[#allocation7 + $0x68] sm:$0xff]
    %v88 = vld [vmem:[#allocation7 + $0x70] sm:$0xff]
    %v89 = vld [vmem:[#allocation7 + $0x78] sm:$0xff]
    %v90 = vld [vmem:[#allocation2] sm:$0xff]
    %v91 = vld [vmem:[#allocation2 + $0x8] sm:$0xff]
    %v92 = vld [vmem:[#allocation2 + $0x10] sm:$0xff]
    %v93 = vld [vmem:[#allocation2 + $0x18] sm:$0xff]
    %94 = vmatprep.subr.mxu0 0.0
    %95 = vmatpush1.msra.mxu0 %v74
    %96 = vmatprep.subr.mxu0 0.0
    %97 = vmatpush1.msra.mxu0 %v75
    %98 = vmatprep.subr.mxu0 0.0
    %99 = vmatpush1.msra.mxu0 %v76
    %100 = vmatprep.subr.mxu0 0.0
    %101 = vmatpush1.msra.mxu0 %v77
    %102 = vmatprep.subr.mxu0 0.0
    %103 = vmatpush1.msra.mxu0 %v78
    %104 = vmatprep.subr.mxu0 0.0
    %105 = vmatpush1.msra.mxu0 %v79
    %106 = vmatprep.subr.mxu0 0.0
    %107 = vmatpush1.msra.mxu0 %v80
    %108 = vmatprep.subr.mxu0 0.0
    %109 = vmatpush1.msra.mxu0 %v81
    %110 = vmatprep.subr.mxu0 0.0
    %111 = vmatpush1.msra.mxu0 %v82
    %112 = vmatprep.subr.mxu0 0.0
    %113 = vmatpush1.msra.mxu0 %v83
    %114 = vmatprep.subr.mxu0 0.0
    %115 = vmatpush1.msra.mxu0 %v84
    %116 = vmatprep.subr.mxu0 0.0
    %117 = vmatpush1.msra.mxu0 %v85
    %118 = vmatprep.subr.mxu0 0.0
    %119 = vmatpush1.msra.mxu0 %v86
    %120 = vmatprep.subr.mxu0 0.0
    %121 = vmatpush1.msra.mxu0 %v87
    %122 = vmatprep.subr.mxu0 0.0
    %123 = vmatpush1.msra.mxu0 %v88
    %124 = vmatprep.subr.mxu0 0.0
    %125 = vmatpush1.msra.mxu0 %v89
    %126 = vmatprep.subr.mxu0 0.0
    %127 = vmatpush1.msra.mxu0 0.0
    %128 = vmatprep.subr.mxu0 0.0
    %129 = vmatpush1.msra.mxu0 0.0
    %130 = vmatprep.subr.mxu0 0.0
    %131 = vmatpush1.msra.mxu0 0.0
    %132 = vmatprep.subr.mxu0 0.0
    %133 = vmatpush1.msra.mxu0 0.0
    %134 = vmatprep.subr.mxu0 0.0
    %135 = vmatpush1.msra.mxu0 0.0
    %136 = vmatprep.subr.mxu0 0.0
    %137 = vmatpush1.msra.mxu0 0.0
    %138 = vmatprep.subr.mxu0 0.0
    %139 = vmatpush1.msra.mxu0 0.0
    %140 = vmatprep.subr.mxu0 0.0
    %141 = vmatpush1.msra.mxu0 0.0
    %142 = vmatprep.subr.mxu0 0.0
    %143 = vmatpush1.msra.mxu0 0.0
    %144 = vmatprep.subr.mxu0 0.0
    %145 = vmatpush1.msra.mxu0 0.0
    %146 = vmatprep.subr.mxu0 0.0
    %147 = vmatpush1.msra.mxu0 0.0
    %148 = vmatprep.subr.mxu0 0.0
    %149 = vmatpush1.msra.mxu0 0.0
    %150 = vmatprep.subr.mxu0 0.0
    %151 = vmatpush1.msra.mxu0 0.0
    %152 = vmatprep.subr.mxu0 0.0
    %153 = vmatpush1.msra.mxu0 0.0
    %154 = vmatprep.subr.mxu0 0.0
    %155 = vmatpush1.msra.mxu0 0.0
    %156 = vmatprep.subr.mxu0 0.0
    %157 = vmatpush1.msra.mxu0 0.0
    %158 = vmatprep.mubr.f32.mxu0 0.0
    %159 = vmatmul.mubr.f32.gmra.mrb[0].mxu0 %v90
    %v160 = vpop.f32.mrb[0].mxu0
    %v161 = vadd.f32 0.0, %v160
    %v162 = vpop.f32.mrb[0].mxu0
    %163 = vmatprep.mubr.f32.mxu0 0.0
    %164 = vmatmul.mubr.f32.gmra.mrb[0].mxu0 %v91
    %v165 = vpop.f32.mrb[0].mxu0
    %v166 = vadd.f32 0.0, %v165
    %v167 = vpop.f32.mrb[0].mxu0
    %168 = vmatprep.mubr.f32.mxu0 0.0
    %169 = vmatmul.mubr.f32.gmra.mrb[0].mxu0 %v92
    %v170 = vpop.f32.mrb[0].mxu0
    %v171 = vadd.f32 0.0, %v170
    %v172 = vpop.f32.mrb[0].mxu0
    %173 = vmatprep.mubr.f32.mxu0 0.0
    %174 = vmatmul.mubr.f32.gmra.mrb[0].mxu0 %v93
    %v175 = vpop.f32.mrb[0].mxu0
    %v176 = vadd.f32 0.0, %v175
    %v177 = vpop.f32.mrb[0].mxu0
    %178 = vdwg.mxu0
    %v179 = vld [vmem:[#allocation5] sm:$0xff]
    %v180 = vld [vmem:[#allocation5 + $0x8] sm:$0xff]
    %v181 = vld [vmem:[#allocation5 + $0x10] sm:$0xff]
    %v182 = vld [vmem:[#allocation5 + $0x18] sm:$0xff]
    %vm183 = vcmp.gt.f32.partialorder %v179, 0.0
    %vm184 = vcmp.gt.f32.partialorder %v180, 0.0
    %vm185 = vcmp.gt.f32.partialorder %v181, 0.0
    %vm186 = vcmp.gt.f32.partialorder %v182, 0.0
    %v187 = vsel %vm183, 1, 0
    %v188 = vsel %vm184, 1, 0
    %v189 = vsel %vm185, 1, 0
    %v190 = vsel %vm186, 1, 0
    %v191 = vcvt.s32.f32 %v187
    %v192 = vcvt.s32.f32 %v188
    %v193 = vcvt.s32.f32 %v189
    %v194 = vcvt.s32.f32 %v190
    %v195 = vmul.f32 %v191, %v161
    %v196 = vmul.f32 %v192, %v166
    %v197 = vmul.f32 %v193, %v171
    %v198 = vmul.f32 %v194, %v176
    %199 = vmax.xlane.f32.xlu0 %v195
    %v200 = vpop.xlane.xlu0 %199
    %201 = vmax.xlane.f32.xlu0 %v196
    %v202 = vpop.xlane.xlu0 %201
    %203 = vmax.xlane.f32.xlu0 %v197
    %v204 = vpop.xlane.xlu0 %203
    %205 = vmax.xlane.f32.xlu0 %v198
    %v206 = vpop.xlane.xlu0 %205
    %v207 = vsub.f32 %v195, %v200
    %v208 = vsub.f32 %v196, %v202
    %v209 = vsub.f32 %v197, %v204
    %v210 = vsub.f32 %v198, %v206
    %v211 = vmul.f32 %v207, 1.442695
    %v212 = vpow.pop %v211
    %v213 = vmul.f32 %v208, 1.442695
    %v214 = vpow.pop %v213
    %v215 = vmul.f32 %v209, 1.442695
    %v216 = vpow.pop %v215
    %v217 = vmul.f32 %v210, 1.442695
    %v218 = vpow.pop %v217
    %219 = vadd.xlane.f32.xlu0 %v212
    %v220 = vpop.xlane.xlu0 %219
    %221 = vadd.xlane.f32.xlu0 %v214
    %v222 = vpop.xlane.xlu0 %221
    %223 = vadd.xlane.f32.xlu0 %v216
    %v224 = vpop.xlane.xlu0 %223
    %225 = vadd.xlane.f32.xlu0 %v218
    %v226 = vpop.xlane.xlu0 %225
    %v227 = vrcp.pop %v220
    %v228 = vrcp.pop %v222
    %v229 = vrcp.pop %v224
    %v230 = vrcp.pop %v226
    %v231 = vmul.f32 %v212, %v227
    %v232 = vmul.f32 %v214, %v228
    %v233 = vmul.f32 %v216, %v229
    %v234 = vmul.f32 %v218, %v230
    %v235 = vld [vmem:[#allocation8] sm:$0xf]
    %v236 = vld [vmem:[#allocation8 + $0x4] sm:$0xf]
    %v237 = vld [vmem:[#allocation8 + $0x8] sm:$0xf]
    %v238 = vld [vmem:[#allocation8 + $0xc] sm:$0xf]
    %v239 = vld [vmem:[#allocation8 + $0x10] sm:$0xf]
    %v240 = vld [vmem:[#allocation8 + $0x14] sm:$0xf]
    %v241 = vld [vmem:[#allocation8 + $0x18] sm:$0xf]
    %v242 = vld [vmem:[#allocation8 + $0x1c] sm:$0xf]
    %v243 = vld [vmem:[#allocation8 + $0x20] sm:$0xf]
    %v244 = vld [vmem:[#allocation8 + $0x24] sm:$0xf]
    %v245 = vld [vmem:[#allocation8 + $0x28] sm:$0xf]
    %v246 = vld [vmem:[#allocation8 + $0x2c] sm:$0xf]
    %v247 = vld [vmem:[#allocation8 + $0x30] sm:$0xf]
    %v248 = vld [vmem:[#allocation8 + $0x34] sm:$0xf]
    %v249 = vld [vmem:[#allocation8 + $0x38] sm:$0xf]
    %v250 = vld [vmem:[#allocation8 + $0x3c] sm:$0xf]
    %v251 = vpack.c.bf16 %v232, %v231
    %v252 = vpack.c.bf16 %v234, %v233
    %v269 = vunpack.c.l.b16 %v235
    %v270 = vunpack.c.l.b16 %v236
    %v271 = vunpack.c.l.b16 %v237
    %v272 = vunpack.c.l.b16 %v238
    %v273 = vunpack.c.l.b16 %v239
    %v274 = vunpack.c.l.b16 %v240
    %v275 = vunpack.c.l.b16 %v241
    %v276 = vunpack.c.l.b16 %v242
    %v277 = vunpack.c.l.b16 %v243
    %v278 = vunpack.c.l.b16 %v244
    %v279 = vunpack.c.l.b16 %v245
    %v280 = vunpack.c.l.b16 %v246
    %v281 = vunpack.c.l.b16 %v247
    %v282 = vunpack.c.l.b16 %v248
    %v283 = vunpack.c.l.b16 %v249
    %v284 = vunpack.c.l.b16 %v250
    %v285 = vpack.c.b16 %v270, %v269
    %v286 = vpack.c.b16 %v272, %v271
    %v287 = vpack.c.b16 %v274, %v273
    %v288 = vpack.c.b16 %v276, %v275
    %v289 = vpack.c.b16 %v278, %v277
    %v290 = vpack.c.b16 %v280, %v279
    %v291 = vpack.c.b16 %v282, %v281
    %v292 = vpack.c.b16 %v284, %v283
    %301 = vmatprep.subr.bf16.mxu0 0
    %302 = vmatpush1.bf16.msra.mxu0 %v285
    %303 = vmatprep.subr.bf16.mxu0 0
    %304 = vmatpush1.bf16.msra.mxu0 %v286
    %305 = vmatprep.subr.bf16.mxu0 0
    %306 = vmatpush1.bf16.msra.mxu0 %v287
    %307 = vmatprep.subr.bf16.mxu0 0
    %308 = vmatpush1.bf16.msra.mxu0 %v288
    %309 = vmatprep.subr.bf16.mxu0 0
    %310 = vmatpush1.bf16.msra.mxu0 %v289
    %311 = vmatprep.subr.bf16.mxu0 0
    %312 = vmatpush1.bf16.msra.mxu0 %v290
    %313 = vmatprep.subr.bf16.mxu0 0
    %314 = vmatpush1.bf16.msra.mxu0 %v291
    %315 = vmatprep.subr.bf16.mxu0 0
    %316 = vmatpush1.bf16.msra.mxu0 %v292
    %317 = vmatprep.subr.bf16.mxu0 0
    %318 = vmatpush1.bf16.msra.mxu0 0
    %319 = vmatprep.subr.bf16.mxu0 0
    %320 = vmatpush1.bf16.msra.mxu0 0
    %321 = vmatprep.subr.bf16.mxu0 0
    %322 = vmatpush1.bf16.msra.mxu0 0
    %323 = vmatprep.subr.bf16.mxu0 0
    %324 = vmatpush1.bf16.msra.mxu0 0
    %325 = vmatprep.subr.bf16.mxu0 0
    %326 = vmatpush1.bf16.msra.mxu0 0
    %327 = vmatprep.subr.bf16.mxu0 0
    %328 = vmatpush1.bf16.msra.mxu0 0
    %329 = vmatprep.subr.bf16.mxu0 0
    %330 = vmatpush1.bf16.msra.mxu0 0
    %331 = vmatprep.subr.bf16.mxu0 0
    %332 = vmatpush1.bf16.msra.mxu0 0
    %333 = vmatprep.mubr.bf16.mxu0 0
    %334 = vmatmul.mubr.bf16.gmra.mrb[0].mxu0 %v251
    %v335 = vpop.f32.mrb[0].mxu0
    %v336 = vadd.f32 0.0, %v335
    %v337 = vpop.f32.mrb[0].mxu0
    %v338 = vpop.f32.mrb[0].mxu0
    %v339 = vadd.f32 0.0, %v338
    %v340 = vpop.f32.mrb[0].mxu0
    %341 = vmatprep.mubr.bf16.mxu0 0
    %342 = vmatmul.mubr.bf16.gmra.mrb[0].mxu0 %v252
    %v343 = vpop.f32.mrb[0].mxu0
    %v344 = vadd.f32 0.0, %v343
    %v345 = vpop.f32.mrb[0].mxu0
    %v346 = vpop.f32.mrb[0].mxu0
    %v347 = vadd.f32 0.0, %v346
    %v348 = vpop.f32.mrb[0].mxu0
    %349 = vdwg.mxu0
    %350 = vst [vmem:[#allocation10] sm:$0xff] %v336
    %351 = vst [vmem:[#allocation10 + $0x8] sm:$0xff] %v339
    %352 = vst [vmem:[#allocation10 + $0x10] sm:$0xff] %v344
    %353 = vst [vmem:[#allocation10 + $0x18] sm:$0xff] %v347
    // Predicated region
    $region34: #{tpu_custom_call.1} parent=1 // pred_check
      _
    $region35: #{tpu_custom_call.1} parent=1 // pred_check_branch
      %355 = sbr.rel (0) target = $region37
    $region36: #{tpu_custom_call.1} parent=1 // pred_region
      %s357 = ssub.s32 512, 512
      %358 = vsyncadd [#allocation4], %s357
      %s359 = sshll.u32 [#allocation10], 4
      %s360 = int_to_ptr.vmem [resolvable:$true] %s359
      %365 = dma.vmem_to_hbm [thread:$0]  %s360, 512, %s4, [#allocation4], 128, 128, 8
    $region37: #{tpu_custom_call.1} parent=1 // pred_fallthru
      _
    // Predicated region
    $region38: #{tpu_custom_call.1} parent=1 // pred_check
      _
    $region39: #{tpu_custom_call.1} parent=1 // pred_check_branch
      %367 = sbr.rel (0) target = $region41
    $region40: #{tpu_custom_call.1} parent=1 // pred_region
      %368 = dma.done [#allocation4], 512
    $region41: #{tpu_custom_call.1} parent=1 // pred_fallthru
      _
    %369 = vsyncpa [#allocation3], 1
    %370 = vsyncpa [#allocation6], 1
    %371 = vsyncpa [#allocation9], 1
    %372 = vsyncpa [#allocation4], 1

</llo_original>
